<compile_context>
chip_gen: v6e
topology: v6e:2x2x1
jax: 0.10.0
libtpu: 0.0.40
codegen_flags: <defaults>
</compile_context>

<pallas_src>
import functools

import numpy as np
import jax
import jax.numpy as jnp
from jax.experimental import pallas as pl
from jax.experimental.pallas import tpu as pltpu


def _qsym_kernel(scalars_ref, x_ref, o_ref, *, scale):
    """Elementwise fake-quantization hot path.

    scalars_ref: (2,) f32 in SMEM: [inv_a, c_over_scale]
      inv_a        = 1 / softplus(a_param)
      c_over_scale = softplus(c_param) / scale
    scale: Python float closure constant = 2**bits / 2 - 1
    x_ref/o_ref: (TM, TN) f32 tiles in VMEM
    """
    inv_a = scalars_ref[0]
    c_over_scale = scalars_ref[1]

    x = x_ref[...]
    # hardtanh(x / a, -1, 1) implemented as clip(x * (1/a))
    xh = jnp.clip(x * inv_a, -1.0, 1.0)
    # round-to-nearest-even matches torch.round; divide-by-scale and *c are
    # folded into the single multiplier c_over_scale.
    o_ref[...] = jnp.round(xh * scale) * c_over_scale


def _round_up(v, m):
    return ((v + m - 1) // m) * m


def q_sym_forward(x, bits, a_param, c_param, *, block_rows=256, lane_width=1024):
    """Q_Sym.forward.  x: any-shape float32. bits/a_param/c_param: 1-elem arrays."""
    bits_np = np.asarray(bits, dtype=np.float32)

    # Identity path (default __init__: bits = [32]).
    if bits_np.shape == (1,) and float(bits_np[0]) == 32.0:
        return x

    # TODO(synk): multi-element `bits` (per-channel bit widths) is not handled;
    # the module's typical use is a single scalar bit-width.
    assert bits_np.shape == (1,), "only scalar bit-width supported"

    # Static quantization scale (bits is a compile-time constant).
    scale = float(2.0 ** float(bits_np[0]) * 0.5 - 1.0)

    # Scalar parameter preprocessing (one-time, stable softplus).
    a = jax.nn.softplus(jnp.asarray(a_param, jnp.float32).reshape(-1)[:1])
    c = jax.nn.softplus(jnp.asarray(c_param, jnp.float32).reshape(-1)[:1])
    inv_a = 1.0 / a
    c_over_scale = c / scale
    scalars = jnp.concatenate([inv_a, c_over_scale]).astype(jnp.float32)  # (2,)

    orig_shape = x.shape
    orig_dtype = x.dtype
    total = int(np.prod(orig_shape))

    # Lane-dense slab: (rows, lane_width) with lane_width a large multiple of 128.
    tn = int(lane_width)
    rows = -(-total // tn)
    if rows <= block_rows:
        # Whole tensor in one block (grid of a single step).
        tm = _round_up(rows, 8)
    else:
        tm = int(block_rows)
    rows_padded = _round_up(rows, tm)
    padded_total = rows_padded * tn

    x_flat = x.reshape(-1)
    if padded_total != total:
        x_flat = jnp.pad(x_flat, (0, padded_total - total))
    x2d = x_flat.reshape(rows_padded, tn)

    out2d = pl.pallas_call(
        functools.partial(_qsym_kernel, scale=scale),
        out_shape=jax.ShapeDtypeStruct((rows_padded, tn), orig_dtype),
        grid_spec=pltpu.PrefetchScalarGridSpec(
            num_scalar_prefetch=0,
            grid=(rows_padded // tm,),
            in_specs=[
                pl.BlockSpec(memory_space=pltpu.MemorySpace.SMEM),  # packed scalars
                pl.BlockSpec((tm, tn), lambda i: (i, 0)),           # x tile
            ],
            out_specs=pl.BlockSpec((tm, tn), lambda i: (i, 0)),
        ),
        compiler_params=pltpu.CompilerParams(
            dimension_semantics=("parallel",)),
    )(scalars, x2d)

    out_flat = out2d.reshape(-1)
    if padded_total != total:
        out_flat = out_flat[:total]
    return out_flat.reshape(orig_shape)


def _reference(x, bits, a_param, c_param):
    """Pure-JAX reference of the PyTorch forward (quantization path)."""
    a = jax.nn.softplus(jnp.asarray(a_param, jnp.float32))
    c = jax.nn.softplus(jnp.asarray(c_param, jnp.float32))
    nlvs = jnp.exp2(jnp.asarray(bits, jnp.float32))
    scale = nlvs * 0.5 - 1.0
    xh = jnp.clip(x / a, -1.0, 1.0)
    return jnp.round(xh * scale) / scale * c


if __name__ == "__main__":
    key = jax.random.PRNGKey(0)
    x = jax.random.normal(key, (2, 4, 16, 16), dtype=jnp.float32) * 2.0

    # Parameters as produced by Q_Sym.initialize(bits=[4], offset=0.3, diff=0.2):
    #   a = c = log(exp(offset + diff) - 1)
    bits = np.array([4.0], dtype=np.float32)
    fill = np.log(np.exp(0.3 + 0.2) - 1.0).astype(np.float32)
    a_param = np.array([fill], dtype=np.float32)
    c_param = np.array([fill], dtype=np.float32)

    # Quantization path (runs the Pallas kernel).
    out = q_sym_forward(x, bits, a_param, c_param)
    out = jax.block_until_ready(out)

    ref = _reference(x, bits, a_param, c_param)
    np.testing.assert_allclose(np.asarray(out), np.asarray(ref),
                               rtol=1e-5, atol=1e-5)

    # Non-128-multiple spatial shape (e.g. ResNet 7x7) must also work now.
    x2 = jax.random.normal(jax.random.PRNGKey(1), (2, 4, 7, 7), jnp.float32) * 2.0
    out2 = jax.block_until_ready(q_sym_forward(x2, bits, a_param, c_param))
    ref2 = _reference(x2, bits, a_param, c_param)
    np.testing.assert_allclose(np.asarray(out2), np.asarray(ref2),
                               rtol=1e-5, atol=1e-5)

    # Identity path (default __init__ parameters: bits = [32]).
    out_id = q_sym_forward(x, np.array([32.0], np.float32), a_param, c_param)
    out_id = jax.block_until_ready(out_id)
    np.testing.assert_allclose(np.asarray(out_id), np.asarray(x))

    print("KERNEL_OK")
</pallas_src>

<mosaic_0001>
module attributes {stable_mosaic.version = 11 : i64} {
  func.func @_qsym_kernel(%arg0: i32, %arg1: memref<2xf32, #tpu.memory_space<smem>>, %arg2: memref<8x1024xf32, #tpu.memory_space<vmem>>, %arg3: memref<8x1024xf32, #tpu.memory_space<vmem>>) attributes {dimension_semantics = [#tpu.dimension_semantics<parallel>], iteration_bounds = array<i64: 1>, scalar_prefetch = 0 : i64, scratch_operands = 0 : i64, tpu.core_type = #tpu.core_type<tc>, window_params = [{transform_indices = @transform_0, window_bounds = array<i64: 2>}, {transform_indices = @transform_1, window_bounds = array<i64: 8, 1024>}, {transform_indices = @transform_2, window_bounds = array<i64: 8, 1024>}]} {
    %c0 = arith.constant 0 : index
    %0 = memref.load %arg1[%c0] : memref<2xf32, #tpu.memory_space<smem>>
    %c1 = arith.constant 1 : index
    %1 = memref.load %arg1[%c1] : memref<2xf32, #tpu.memory_space<smem>>
    %c0_0 = arith.constant 0 : index
    %c0_1 = arith.constant 0 : index
    %2 = vector.load %arg2[%c0_0, %c0_1] : memref<8x1024xf32, #tpu.memory_space<vmem>>, vector<8x1024xf32>
    %3 = vector.broadcast %0 : f32 to vector<8x1024xf32>
    %4 = arith.mulf %2, %3 : vector<8x1024xf32>
    %cst = arith.constant -1.000000e+00 : f32
    %cst_2 = arith.constant 1.000000e+00 : f32
    %5 = vector.broadcast %cst : f32 to vector<8x1024xf32>
    %6 = arith.maximumf %5, %4 : vector<8x1024xf32>
    %7 = vector.broadcast %cst_2 : f32 to vector<8x1024xf32>
    %8 = arith.minimumf %7, %6 : vector<8x1024xf32>
    %cst_3 = arith.constant 7.000000e+00 : f32
    %9 = vector.broadcast %cst_3 : f32 to vector<8x1024xf32>
    %10 = arith.mulf %8, %9 : vector<8x1024xf32>
    %11 = math.roundeven %10 : vector<8x1024xf32>
    %12 = vector.broadcast %1 : f32 to vector<8x1024xf32>
    %13 = arith.mulf %11, %12 : vector<8x1024xf32>
    %c0_4 = arith.constant 0 : index
    %c0_5 = arith.constant 0 : index
    %14 = vector.load %arg3[%c0_4, %c0_5] : memref<8x1024xf32, #tpu.memory_space<vmem>>, vector<8x1024xf32>
    tpu.vector_store %arg3[%c0_4, %c0_5], %13 {strides = array<i32>} : memref<8x1024xf32, #tpu.memory_space<vmem>>, vector<8x1024xf32>,
    return
  }
  func.func @transform_0(%arg0: i32) -> i32 {
    %c0_i32 = arith.constant 0 : i32
    %c0_i32_0 = arith.constant 0 : i32
    return %c0_i32 : i32
  }
  func.func @transform_1(%arg0: i32) -> (i32, i32) {
    %c0_i32 = arith.constant 0 : i32
    %c0_i32_0 = arith.constant 0 : i32
    return %arg0, %c0_i32 : i32, i32
  }
  func.func @transform_2(%arg0: i32) -> (i32, i32) {
    %c0_i32 = arith.constant 0 : i32
    %c0_i32_0 = arith.constant 0 : i32
    return %arg0, %c0_i32 : i32, i32
  }
}

</mosaic_0001>

<llo_original>
// kernel: tpu_custom_call.1
$region0: #{tpu_custom_call.1}
  #allocation0 [shape = 'u32[]', space=smem, size = 0x4, offset = 0x4, fixed_abs, tag = 'smem constant byte address 0x4 - core index']
  #allocation1 [shape = 'u32[144,128]{1,0:T(1,128)}', space=vmem, size = 0x12000, scoped, tag = 'internal scratch']
  %s0 = inlined_call_operand.hbm [shape: f32[2], index: 0, kind: input, shape index: {}]
  %s1 = inlined_call_operand.hbm [shape: f32[8,1024], index: 1, kind: input, shape index: {}]
  %s2 = inlined_call_operand.hbm [shape: f32[8,1024], index: 2, kind: output, shape index: {}]
  %s3 = sld [smem:[#allocation0]]
  $region26: #{tpu_custom_call.1} parent=0
    _
  %s5 = ssub.s32 1, %s3
  %s6 = scalar_select 0, %s5, %s3
  $region1: #{tpu_custom_call.1} parent=0
    #allocation2 [shape = 'u8[512]{0}', space=smem, size = 0x200, scoped, tag = 'input window, operand 0, single buffered']
    #allocation3 [shape = 's32[1]{0}', space=sflag, size = 0x4, scoped, tag = 'scoped memory for tpu_custom_call.1']
    #allocation4 [shape = 's32[1]{0}', space=sflag, size = 0x4, scoped, tag = 'scoped memory for tpu_custom_call.1']
    #allocation5 [shape = 's32[1]{0}', space=sflag, size = 0x4, scoped, tag = 'scoped memory for tpu_custom_call.1']
    #allocation6 [shape = 'u8[32768]{0}', space=vmem, size = 0x8000, scoped, tag = 'input window, operand 1, single buffered']
    #allocation7 [shape = 'u8[32768]{0}', space=vmem, size = 0x8000, scoped, tag = 'output window, operand 0, single buffered']
    %7 = vsyncpa [#allocation5], 0
    %8 = vsyncpa [#allocation3], 0
    %9 = vsyncpa [#allocation4], 0
    // Predicated region
    $region2: #{tpu_custom_call.1} parent=1 // pred_check
      _
    $region3: #{tpu_custom_call.1} parent=1 // pred_check_branch
      %11 = sbr.rel (0) target = $region5
    $region4: #{tpu_custom_call.1} parent=1 // pred_region
      %s13 = ssub.s32 16, 16
      %14 = vsyncadd [#allocation5], %s13
      %17 = dma.hbm_to_smem %s0, 16, [#allocation2], [#allocation5]
    $region5: #{tpu_custom_call.1} parent=1 // pred_fallthru
      _
    // Predicated region
    $region6: #{tpu_custom_call.1} parent=1 // pred_check
      _
    $region7: #{tpu_custom_call.1} parent=1 // pred_check_branch
      %19 = sbr.rel (0) target = $region9
    $region8: #{tpu_custom_call.1} parent=1 // pred_region
      %s21 = ssub.s32 1024, 1024
      %22 = vsyncadd [#allocation3], %s21
      %s24 = sshll.u32 [#allocation6], 4
      %s25 = int_to_ptr.vmem [resolvable:$true] %s24
      %27 = dma.hbm_to_vmem [thread:$0]  %s1, 1024, %s25, [#allocation3]
    $region9: #{tpu_custom_call.1} parent=1 // pred_fallthru
      _
    // Predicated region
    $region10: #{tpu_custom_call.1} parent=1 // pred_check
      _
    $region11: #{tpu_custom_call.1} parent=1 // pred_check_branch
      %29 = sbr.rel (0) target = $region13
    $region12: #{tpu_custom_call.1} parent=1 // pred_region
      %30 = dma.done [#allocation5], 16
    $region13: #{tpu_custom_call.1} parent=1 // pred_fallthru
      _
    // Predicated region
    $region14: #{tpu_custom_call.1} parent=1 // pred_check
      _
    $region15: #{tpu_custom_call.1} parent=1 // pred_check_branch
      %32 = sbr.rel (0) target = $region17
    $region16: #{tpu_custom_call.1} parent=1 // pred_region
      %33 = dma.done [#allocation3], 1024
    $region17: #{tpu_custom_call.1} parent=1 // pred_fallthru
      _
    %34 = sfence
    %s35 = sld [smem:[#allocation2]]
    %s36 = sld [smem:[#allocation2 + $0x1]]
    %v37 = vld [vmem:[#allocation6] sm:$0xff]
    %v38 = vld [vmem:[#allocation6 + $0x8] sm:$0xff]
    %v39 = vld [vmem:[#allocation6 + $0x10] sm:$0xff]
    %v40 = vld [vmem:[#allocation6 + $0x18] sm:$0xff]
    %v41 = vld [vmem:[#allocation6 + $0x20] sm:$0xff]
    %v42 = vld [vmem:[#allocation6 + $0x28] sm:$0xff]
    %v43 = vld [vmem:[#allocation6 + $0x30] sm:$0xff]
    %v44 = vld [vmem:[#allocation6 + $0x38] sm:$0xff]
    %v45 = vstv %s35
    %v46 = vmul.f32 %v37, %v45
    %v47 = vmul.f32 %v38, %v45
    %v48 = vmul.f32 %v39, %v45
    %v49 = vmul.f32 %v40, %v45
    %v50 = vmul.f32 %v41, %v45
    %v51 = vmul.f32 %v42, %v45
    %v52 = vmul.f32 %v43, %v45
    %v53 = vmul.f32 %v44, %v45
    %v54 = vmax.f32 %v46, -1.0
    %v55 = vmax.f32 %v47, -1.0
    %v56 = vmax.f32 %v48, -1.0
    %v57 = vmax.f32 %v49, -1.0
    %v58 = vmax.f32 %v50, -1.0
    %v59 = vmax.f32 %v51, -1.0
    %v60 = vmax.f32 %v52, -1.0
    %v61 = vmax.f32 %v53, -1.0
    %v62 = vmin.f32 %v54, 1.0
    %v63 = vmin.f32 %v55, 1.0
    %v64 = vmin.f32 %v56, 1.0
    %v65 = vmin.f32 %v57, 1.0
    %v66 = vmin.f32 %v58, 1.0
    %v67 = vmin.f32 %v59, 1.0
    %v68 = vmin.f32 %v60, 1.0
    %v69 = vmin.f32 %v61, 1.0
    %v70 = vmul.f32 %v62, 7.0
    %v71 = vmul.f32 %v63, 7.0
    %v72 = vmul.f32 %v64, 7.0
    %v73 = vmul.f32 %v65, 7.0
    %v74 = vmul.f32 %v66, 7.0
    %v75 = vmul.f32 %v67, 7.0
    %v76 = vmul.f32 %v68, 7.0
    %v77 = vmul.f32 %v69, 7.0
    %v78 = vround.ne.pseudo %v70
    %v79 = vround.ne.pseudo %v71
    %v80 = vround.ne.pseudo %v72
    %v81 = vround.ne.pseudo %v73
    %v82 = vround.ne.pseudo %v74
    %v83 = vround.ne.pseudo %v75
    %v84 = vround.ne.pseudo %v76
    %v85 = vround.ne.pseudo %v77
    %v86 = vstv %s36
    %v87 = vmul.f32 %v78, %v86
    %v88 = vmul.f32 %v79, %v86
    %v89 = vmul.f32 %v80, %v86
    %v90 = vmul.f32 %v81, %v86
    %v91 = vmul.f32 %v82, %v86
    %v92 = vmul.f32 %v83, %v86
    %v93 = vmul.f32 %v84, %v86
    %v94 = vmul.f32 %v85, %v86
    %95 = vst [vmem:[#allocation7] sm:$0xff] %v87
    %96 = vst [vmem:[#allocation7 + $0x8] sm:$0xff] %v88
    %97 = vst [vmem:[#allocation7 + $0x10] sm:$0xff] %v89
    %98 = vst [vmem:[#allocation7 + $0x18] sm:$0xff] %v90
    %99 = vst [vmem:[#allocation7 + $0x20] sm:$0xff] %v91
    %100 = vst [vmem:[#allocation7 + $0x28] sm:$0xff] %v92
    %101 = vst [vmem:[#allocation7 + $0x30] sm:$0xff] %v93
    %102 = vst [vmem:[#allocation7 + $0x38] sm:$0xff] %v94
    // Predicated region
    $region18: #{tpu_custom_call.1} parent=1 // pred_check
      _
    $region19: #{tpu_custom_call.1} parent=1 // pred_check_branch
      %104 = sbr.rel (0) target = $region21
    $region20: #{tpu_custom_call.1} parent=1 // pred_region
      %s106 = ssub.s32 1024, 1024
      %107 = vsyncadd [#allocation4], %s106
      %s109 = sshll.u32 [#allocation7], 4
      %s110 = int_to_ptr.vmem [resolvable:$true] %s109
      %112 = dma.vmem_to_hbm [thread:$0]  %s110, 1024, %s2, [#allocation4]
    $region21: #{tpu_custom_call.1} parent=1 // pred_fallthru
      _
    // Predicated region
    $region22: #{tpu_custom_call.1} parent=1 // pred_check
      _
    $region23: #{tpu_custom_call.1} parent=1 // pred_check_branch
      %114 = sbr.rel (0) target = $region25
    $region24: #{tpu_custom_call.1} parent=1 // pred_region
      %115 = dma.done [#allocation4], 1024
    $region25: #{tpu_custom_call.1} parent=1 // pred_fallthru
      _
    %116 = vsyncpa [#allocation3], 1
    %117 = vsyncpa [#allocation4], 1
    %118 = vsyncpa [#allocation5], 1

</llo_original>
